<compile_context>
chip_gen: v7x
topology: tpu7x:2x2x1
jax: 0.10.0
libtpu: 0.0.40
codegen_flags: <defaults>
</compile_context>

<pallas_src>
import functools

import jax
import jax.numpy as jnp
import numpy as np
from jax.experimental import pallas as pl
from jax.experimental.pallas import tpu as pltpu

NEG_SLOPE = 0.2      # PyG GATConv default negative_slope
NEG_INF = -1e30


def gat_kernel(x_ref, w_ref, wds_ref, rbias_ref, pmask_ref, bias_ref, o_ref):
    # Per grid step:
    #   x (M, D_in), w (D_in, HF), wds (HF, 2K) = [att_dst expansion | att_src expansion],
    #   rbias (M, 2K) = [source-row pick mask | additive adjacency bias] (bf16),
    #   pmask (K, HF) head placement mask (bf16), bias (1, HF), out (M, HF).
    #   M = b_blk*N target rows, K = heads*M packed (head, source) lanes.
    M = x_ref.shape[0]
    HF = w_ref.shape[1]
    K = pmask_ref.shape[0]
    heads = K // M

    x = x_ref[...]
    w = w_ref[...]

    # Linear projection for all samples & heads at once (MXU).
    h = jnp.dot(x, w, preferred_element_type=jnp.float32)                  # (M, HF)

    # Fused per-head attention logits: one matmul gives [t_dst | t_src].
    t = jnp.dot(h, wds_ref[...], preferred_element_type=jnp.float32)      # (M, 2K)
    t_dst = t[:, :K]                                                       # (M, K)
    t_src = t[:, K:]                                                       # (M, K)

    rowmask = rbias_ref[:, :K]   # bf16 0/1, exact
    negbias = rbias_ref[:, K:]   # bf16 ~-1e30 on non-edges / cross-sample lanes

    # Source-side term depends only on lane k: pick row m(k) of t_src per lane.
    src_row = jnp.sum(t_src * rowmask, axis=0, keepdims=True)              # (1, K)

    # e[m, k] = LeakyReLU(a_dst[target m] + a_src[source m(k)]) for head(k), masked.
    e = t_dst + src_row
    e = jnp.where(e > 0, e, NEG_SLOPE * e)
    e = e + negbias
    e = e - jnp.max(e, axis=-1, keepdims=True)   # per-row shift (softmax-invariant)
    p = jnp.exp(e)                               # masked entries underflow to exactly 0

    # Block-diagonal h via sublane replication (no MXU, no (K, M) selector constant).
    pmask = pmask_ref[...].astype(jnp.float32)                             # (K, HF)
    h_big = jnp.tile(h, (heads, 1)) * pmask                                # (K, HF)

    # Merged aggregation + per-head softmax denominators: one K-contraction matmul
    # on 2*HF lanes (lane-dense, full vregs).
    rhs = jnp.concatenate([h_big, pmask], axis=1)                          # (K, 2*HF)
    nd = jnp.dot(p, rhs, preferred_element_type=jnp.float32)               # (M, 2*HF)
    numer = nd[:, :HF]
    denom = jnp.maximum(nd[:, HF:], 1e-30)   # guard isolated rows (self-loops prevent this)

    inv = pl.reciprocal(denom, approx=True)   # EUP slot (otherwise idle)
    inv = inv * (2.0 - denom * inv)           # one Newton step -> ~f32 precision

    o_ref[...] = numer * inv + bias_ref[...]


def _num_tensorcores():
    """Best-effort TensorCore-per-chip count (v7x / megacore => 2)."""
    try:
        kind = jax.devices()[0].device_kind.lower()
    except Exception:  # pragma: no cover
        return 1
    if "v7" in kind or "v4" in kind or "v5p" in kind:
        return 2
    return 1


def _build_constants(adj_np, att_src_np, att_dst_np, heads, b_blk, num_joints, head_dim):
    """Host-side constant matrices encoding the packed (head, source) lane layout."""
    N, F, H = num_joints, head_dim, heads
    HF = H * F
    M = b_blk * N            # target rows per grid block
    K = H * M                # packed lanes: k = head*M + source_row

    k_hd = np.arange(K) // M             # head of packed lane k
    k_m = np.arange(K) % M               # source row (within block) of lane k
    c_hd = np.arange(HF) // F            # head of output column c
    c_f = np.arange(HF) % F              # feature-within-head of column c

    head_match_ck = (c_hd[:, None] == k_hd[None, :]).astype(np.float32)       # (HF, K)
    w_dst_exp = att_dst_np[k_hd[None, :], c_f[:, None]] * head_match_ck       # (HF, K)
    w_src_exp = att_src_np[k_hd[None, :], c_f[:, None]] * head_match_ck       # (HF, K)
    wds = np.concatenate([w_dst_exp, w_src_exp], axis=1).astype(np.float32)   # (HF, 2K)

    row_mask = (np.arange(M)[:, None] == k_m[None, :]).astype(np.float32)     # (M, K)
    r = np.arange(M)
    same_sample = (r[:, None] // N) == (k_m[None, :] // N)                    # (M, K)
    adj_gather = adj_np[r[:, None] % N, k_m[None, :] % N]                     # (M, K)
    neg_bias = np.where(same_sample & (adj_gather > 0), 0.0, NEG_INF)
    rbias = np.concatenate([row_mask, neg_bias], axis=1)                      # (M, 2K)

    p_mask = (k_hd[:, None] == c_hd[None, :]).astype(np.float32)              # (K, HF)

    return (jnp.asarray(wds, dtype=jnp.float32),
            jnp.asarray(rbias, dtype=jnp.bfloat16),   # 0/1 + (-1e30) masks: bf16 is fine
            jnp.asarray(p_mask, dtype=jnp.bfloat16))  # 0/1 mask: bf16 exact


_CONST_CACHE = {}


def skeleton_graph_attention(x, adj, w, att_src, att_dst, bias, heads,
                             *, block_rows=None):
    """Dense GATConv forward: x (B, N, D_in), adj (N, N) -> (B, N, heads*head_dim)."""
    B, N, D_in = x.shape
    HF = w.shape[1]
    F = HF // heads

    # Cap K = heads * b_blk * N at ~512 so (M, K) intermediates stay far from spill.
    if block_rows is None:
        block_rows = max(N, 512 // heads)

    b_blk = max(1, min(B, max(1, block_rows // N)))
    while B % b_blk != 0:
        b_blk -= 1
    # Multi-TensorCore chips: keep >= 2 grid blocks so the "parallel" axis feeds
    # both cores (and cross-sample dead lanes disappear: K = heads*N).
    if _num_tensorcores() >= 2 and B >= 2:
        cand = max(1, min(b_blk, B // 2))
        while B % cand != 0:
            cand -= 1
        if (cand * N) % 8 == 0:
            b_blk = cand
    if (B // b_blk) > 1 and (b_blk * N) % 8 != 0:
        b_blk = B                       # keep row blocks sublane-aligned

    M = b_blk * N
    K = heads * M
    n_blocks = B // b_blk
    grid = (n_blocks,)

    # Cache the host-built constants (keyed on graph/params/layout) so repeated calls
    # don't redo numpy mask construction + host->device upload.
    adj_np = np.asarray(adj, dtype=np.float32)
    as_np = np.asarray(att_src, dtype=np.float32)
    ad_np = np.asarray(att_dst, dtype=np.float32)
    ckey = (heads, b_blk, N, F, adj_np.tobytes(), as_np.tobytes(), ad_np.tobytes())
    if ckey not in _CONST_CACHE:
        _CONST_CACHE[ckey] = _build_constants(adj_np, as_np, ad_np, heads, b_blk, N, F)
    wds, rbias, pmask = _CONST_CACHE[ckey]

    x2 = x.reshape(B * N, D_in)
    bias2 = bias.reshape(1, HF)

    # Advisory cost estimate so XLA schedules this tiny custom call tightly.
    flops = n_blocks * (2 * M * D_in * HF + 2 * M * HF * (2 * K) + 2 * M * K * (2 * HF))
    bytes_accessed = (x2.size * 4 + w.size * 4 + wds.size * 4 + rbias.size * 2
                      + pmask.size * 2 + bias2.size * 4 + B * N * HF * 4)
    cost = pl.CostEstimate(flops=int(flops),
                           transcendentals=int(n_blocks * M * K),
                           bytes_accessed=int(bytes_accessed))

    # TODO(synk): if B grows large, pack two target rows per output row in the wrapper
    # so stores are 128-lane dense (HF=64 < 128); irrelevant at B=2.
    out = pl.pallas_call(
        gat_kernel,
        out_shape=jax.ShapeDtypeStruct((B * N, HF), jnp.float32),
        grid=grid,
        in_specs=[
            pl.BlockSpec((M, D_in), lambda g: (g, 0)),       # x rows of this batch block
            pl.BlockSpec((D_in, HF), lambda g: (0, 0)),      # W (shared)
            pl.BlockSpec((HF, 2 * K), lambda g: (0, 0)),     # [att_dst | att_src] expansion
            pl.BlockSpec((M, 2 * K), lambda g: (0, 0)),      # [row-pick mask | adjacency bias]
            pl.BlockSpec((K, HF), lambda g: (0, 0)),         # head placement mask
            pl.BlockSpec((1, HF), lambda g: (0, 0)),         # bias
        ],
        out_specs=pl.BlockSpec((M, HF), lambda g: (g, 0)),
        compiler_params=pltpu.CompilerParams(
            dimension_semantics=("parallel",)),
        cost_estimate=cost,
    )(x2, w, wds, rbias, pmask, bias2)
    return out.reshape(B, N, HF)


def ref_gat(x, adj, w, att_src, att_dst, bias, heads):
    """Pure-JAX reference (dense GATConv, heads concatenated)."""
    B, N, D = x.shape
    HF = w.shape[1]
    F = HF // heads
    h = jnp.einsum('bnd,df->bnf', x, w).reshape(B, N, heads, F)
    a_s = jnp.einsum('bnhf,hf->bnh', h, att_src)
    a_d = jnp.einsum('bnhf,hf->bnh', h, att_dst)
    e = a_d[:, :, None, :] + a_s[:, None, :, :]              # (B, i, j, h)
    e = jnp.where(e > 0, e, NEG_SLOPE * e)
    e = jnp.where(adj[None, :, :, None] > 0, e, NEG_INF)
    e = e - e.max(axis=2, keepdims=True)
    p = jnp.exp(e)
    alpha = p / p.sum(axis=2, keepdims=True)
    out = jnp.einsum('bijh,bjhf->bihf', alpha, h).reshape(B, N, HF)
    return out + bias


if __name__ == "__main__":
    B = 2             # batch
    N = 16            # num_joints
    D_IN = 32         # input_dim
    D_OUT = 64        # output_dim
    HEADS = 8
    F = D_OUT // HEADS

    key = jax.random.PRNGKey(0)
    k_x, k_w, k_as, k_ad = jax.random.split(key, 4)

    x = jax.random.normal(k_x, (B, N, D_IN), dtype=jnp.float32)

    # bone_edges: simple skeleton tree over 16 joints, symmetric, with self-loops
    # (PyG GATConv default add_self_loops=True).
    parents = [0, 0, 1, 2, 3, 1, 5, 6, 7, 1, 9, 10, 11, 0, 13, 14]
    adj = np.zeros((N, N), dtype=np.float32)
    for child, parent in enumerate(parents):
        if child != parent:
            adj[child, parent] = 1.0
            adj[parent, child] = 1.0
    adj = jnp.asarray(adj + np.eye(N, dtype=np.float32))

    # GATConv-shaped parameters: lin.weight (D_IN, H*F), att_src/att_dst (H, F), bias (H*F,)
    w = jax.random.normal(k_w, (D_IN, HEADS * F), dtype=jnp.float32) * jnp.sqrt(
        2.0 / (D_IN + HEADS * F))
    att_src = jax.random.normal(k_as, (HEADS, F), dtype=jnp.float32) * jnp.sqrt(
        2.0 / (F + 1))
    att_dst = jax.random.normal(k_ad, (HEADS, F), dtype=jnp.float32) * jnp.sqrt(
        2.0 / (F + 1))
    bias = jnp.zeros((HEADS * F,), dtype=jnp.float32)          # PyG zero-inits bias

    out = skeleton_graph_attention(x, adj, w, att_src, att_dst, bias, HEADS)
    out = jax.block_until_ready(out)

    expected = ref_gat(x, adj, w, att_src, att_dst, bias, HEADS)
    assert out.shape == (B, N, D_OUT)
    assert jnp.allclose(out, expected, rtol=2e-5, atol=2e-5), (
        float(jnp.max(jnp.abs(out - expected))))

    print("KERNEL_OK")
</pallas_src>

<mosaic_0001>
module attributes {stable_mosaic.version = 11 : i64} {
  func.func @gat_kernel(%arg0: i32, %arg1: memref<32x32xf32, #tpu.memory_space<vmem>>, %arg2: memref<32x64xf32, #tpu.memory_space<vmem>>, %arg3: memref<64x512xf32, #tpu.memory_space<vmem>>, %arg4: memref<32x512xbf16, #tpu.memory_space<vmem>>, %arg5: memref<256x64xbf16, #tpu.memory_space<vmem>>, %arg6: memref<1x64xf32, #tpu.memory_space<vmem>>, %arg7: memref<32x64xf32, #tpu.memory_space<vmem>>) attributes {dimension_semantics = [#tpu.dimension_semantics<parallel>], iteration_bounds = array<i64: 1>, scalar_prefetch = 0 : i64, scratch_operands = 0 : i64, tpu.core_type = #tpu.core_type<tc>, window_params = [{transform_indices = @transform_0, window_bounds = array<i64: 32, 32>}, {pipeline_mode = #tpu.pipeline_mode<synchronous>, transform_indices = @transform_1, window_bounds = array<i64: 32, 64>}, {pipeline_mode = #tpu.pipeline_mode<synchronous>, transform_indices = @transform_2, window_bounds = array<i64: 64, 512>}, {pipeline_mode = #tpu.pipeline_mode<synchronous>, transform_indices = @transform_3, window_bounds = array<i64: 32, 512>}, {pipeline_mode = #tpu.pipeline_mode<synchronous>, transform_indices = @transform_4, window_bounds = array<i64: 256, 64>}, {pipeline_mode = #tpu.pipeline_mode<synchronous>, transform_indices = @transform_5, window_bounds = array<i64: 1, 64>}, {transform_indices = @transform_6, window_bounds = array<i64: 32, 64>}]} {
    %c0 = arith.constant 0 : index
    %c0_0 = arith.constant 0 : index
    %0 = vector.load %arg1[%c0, %c0_0] : memref<32x32xf32, #tpu.memory_space<vmem>>, vector<32x32xf32>
    %c0_1 = arith.constant 0 : index
    %c0_2 = arith.constant 0 : index
    %1 = vector.load %arg2[%c0_1, %c0_2] : memref<32x64xf32, #tpu.memory_space<vmem>>, vector<32x64xf32>
    %cst = arith.constant dense<0.000000e+00> : vector<32x64xf32>
    %2 = tpu.matmul %0, %1, %cst {dimension_numbers = #tpu.dot_dimension_numbers<[1], [0], [0], [1], [0, 0, 1, 1], [], []>} : vector<32x32xf32>, vector<32x64xf32>, vector<32x64xf32> -> vector<32x64xf32>
    %c0_3 = arith.constant 0 : index
    %c0_4 = arith.constant 0 : index
    %3 = vector.load %arg3[%c0_3, %c0_4] : memref<64x512xf32, #tpu.memory_space<vmem>>, vector<64x512xf32>
    %cst_5 = arith.constant dense<0.000000e+00> : vector<32x512xf32>
    %4 = tpu.matmul %2, %3, %cst_5 {dimension_numbers = #tpu.dot_dimension_numbers<[1], [0], [0], [1], [0, 0, 1, 1], [], []>} : vector<32x64xf32>, vector<64x512xf32>, vector<32x512xf32> -> vector<32x512xf32>
    %5 = vector.extract_strided_slice %4 {offsets = [0, 0], sizes = [32, 256], strides = [1, 1]} : vector<32x512xf32> to vector<32x256xf32>
    %6 = vector.extract_strided_slice %4 {offsets = [0, 256], sizes = [32, 256], strides = [1, 1]} : vector<32x512xf32> to vector<32x256xf32>
    %c0_6 = arith.constant 0 : index
    %c0_7 = arith.constant 0 : index
    %7 = vector.load %arg4[%c0_6, %c0_7] : memref<32x512xbf16, #tpu.memory_space<vmem>>, vector<32x256xbf16>
    %c0_8 = arith.constant 0 : index
    %c256 = arith.constant 256 : index
    %8 = vector.load %arg4[%c0_8, %c256] : memref<32x512xbf16, #tpu.memory_space<vmem>>, vector<32x256xbf16>
    %9 = arith.extf %7 : vector<32x256xbf16> to vector<32x256xf32>
    %10 = arith.mulf %6, %9 : vector<32x256xf32>
    %cst_9 = arith.constant dense<0.000000e+00> : vector<256xf32>
    %11 = vector.multi_reduction <add>, %10, %cst_9 [0] : vector<32x256xf32> to vector<256xf32>
    %12 = vector.shape_cast %11 : vector<256xf32> to vector<1x256xf32>
    %13 = vector.broadcast %12 : vector<1x256xf32> to vector<32x256xf32>
    %14 = arith.addf %5, %13 : vector<32x256xf32>
    %cst_10 = arith.constant 0.000000e+00 : f32
    %15 = vector.broadcast %cst_10 : f32 to vector<32x256xf32>
    %16 = arith.cmpf ogt, %14, %15 : vector<32x256xf32>
    %cst_11 = arith.constant 2.000000e-01 : f32
    %17 = vector.broadcast %cst_11 : f32 to vector<32x256xf32>
    %18 = arith.mulf %17, %14 : vector<32x256xf32>
    %19 = arith.select %16, %14, %18 : vector<32x256xi1>, vector<32x256xf32>
    %20 = arith.extf %8 : vector<32x256xbf16> to vector<32x256xf32>
    %21 = arith.addf %19, %20 : vector<32x256xf32>
    %cst_12 = arith.constant dense<0xFF800000> : vector<32xf32>
    %22 = vector.multi_reduction <maximumf>, %21, %cst_12 [1] : vector<32x256xf32> to vector<32xf32>
    %23 = vector.shape_cast %22 : vector<32xf32> to vector<32x1xf32>
    %24 = vector.broadcast %23 : vector<32x1xf32> to vector<32x256xf32>
    %25 = arith.subf %21, %24 : vector<32x256xf32>
    %26 = math.exp %25 : vector<32x256xf32>
    %c0_13 = arith.constant 0 : index
    %c0_14 = arith.constant 0 : index
    %27 = vector.load %arg5[%c0_13, %c0_14] : memref<256x64xbf16, #tpu.memory_space<vmem>>, vector<256x64xbf16>
    %28 = arith.extf %27 : vector<256x64xbf16> to vector<256x64xf32>
    %29 = tpu.concatenate %2, %2, %2, %2, %2, %2, %2, %2 in 0 : vector<32x64xf32>, vector<32x64xf32>, vector<32x64xf32>, vector<32x64xf32>, vector<32x64xf32>, vector<32x64xf32>, vector<32x64xf32>, vector<32x64xf32> -> vector<256x64xf32>
    %30 = arith.mulf %29, %28 : vector<256x64xf32>
    %31 = tpu.concatenate %30, %28 in 1 : vector<256x64xf32>, vector<256x64xf32> -> vector<256x128xf32>
    %cst_15 = arith.constant dense<0.000000e+00> : vector<32x128xf32>
    %32 = tpu.matmul %26, %31, %cst_15 {dimension_numbers = #tpu.dot_dimension_numbers<[1], [0], [0], [1], [0, 0, 1, 1], [], []>} : vector<32x256xf32>, vector<256x128xf32>, vector<32x128xf32> -> vector<32x128xf32>
    %33 = vector.extract_strided_slice %32 {offsets = [0, 0], sizes = [32, 64], strides = [1, 1]} : vector<32x128xf32> to vector<32x64xf32>
    %34 = vector.extract_strided_slice %32 {offsets = [0, 64], sizes = [32, 64], strides = [1, 1]} : vector<32x128xf32> to vector<32x64xf32>
    %cst_16 = arith.constant 1.000000e-30 : f32
    %35 = vector.broadcast %cst_16 : f32 to vector<32x64xf32>
    %36 = arith.maximumf %34, %35 : vector<32x64xf32>
    %37 = tpu.reciprocal %36 {approx = true} : vector<32x64xf32> -> vector<32x64xf32>
    %38 = arith.mulf %36, %37 : vector<32x64xf32>
    %cst_17 = arith.constant 2.000000e+00 : f32
    %39 = vector.broadcast %cst_17 : f32 to vector<32x64xf32>
    %40 = arith.subf %39, %38 : vector<32x64xf32>
    %41 = arith.mulf %37, %40 : vector<32x64xf32>
    %42 = arith.mulf %33, %41 : vector<32x64xf32>
    %c0_18 = arith.constant 0 : index
    %c0_19 = arith.constant 0 : index
    %43 = vector.load %arg6[%c0_18, %c0_19] : memref<1x64xf32, #tpu.memory_space<vmem>>, vector<1x64xf32>
    %44 = vector.broadcast %43 : vector<1x64xf32> to vector<32x64xf32>
    %45 = arith.addf %42, %44 : vector<32x64xf32>
    %c0_20 = arith.constant 0 : index
    %c0_21 = arith.constant 0 : index
    %46 = vector.load %arg7[%c0_20, %c0_21] : memref<32x64xf32, #tpu.memory_space<vmem>>, vector<32x64xf32>
    tpu.vector_store %arg7[%c0_20, %c0_21], %45 {strides = array<i32>} : memref<32x64xf32, #tpu.memory_space<vmem>>, vector<32x64xf32>,
    return
  }
  func.func @transform_0(%arg0: i32) -> (i32, i32) {
    %c0_i32 = arith.constant 0 : i32
    %c0_i32_0 = arith.constant 0 : i32
    return %arg0, %c0_i32 : i32, i32
  }
  func.func @transform_1(%arg0: i32) -> (i32, i32) {
    %c0_i32 = arith.constant 0 : i32
    %c0_i32_0 = arith.constant 0 : i32
    %c0_i32_1 = arith.constant 0 : i32
    return %c0_i32, %c0_i32_0 : i32, i32
  }
  func.func @transform_2(%arg0: i32) -> (i32, i32) {
    %c0_i32 = arith.constant 0 : i32
    %c0_i32_0 = arith.constant 0 : i32
    %c0_i32_1 = arith.constant 0 : i32
    return %c0_i32, %c0_i32_0 : i32, i32
  }
  func.func @transform_3(%arg0: i32) -> (i32, i32) {
    %c0_i32 = arith.constant 0 : i32
    %c0_i32_0 = arith.constant 0 : i32
    %c0_i32_1 = arith.constant 0 : i32
    return %c0_i32, %c0_i32_0 : i32, i32
  }
  func.func @transform_4(%arg0: i32) -> (i32, i32) {
    %c0_i32 = arith.constant 0 : i32
    %c0_i32_0 = arith.constant 0 : i32
    %c0_i32_1 = arith.constant 0 : i32
    return %c0_i32, %c0_i32_0 : i32, i32
  }
  func.func @transform_5(%arg0: i32) -> (i32, i32) {
    %c0_i32 = arith.constant 0 : i32
    %c0_i32_0 = arith.constant 0 : i32
    %c0_i32_1 = arith.constant 0 : i32
    return %c0_i32, %c0_i32_0 : i32, i32
  }
  func.func @transform_6(%arg0: i32) -> (i32, i32) {
    %c0_i32 = arith.constant 0 : i32
    %c0_i32_0 = arith.constant 0 : i32
    return %arg0, %c0_i32 : i32, i32
  }
}

</mosaic_0001>

<llo_original>
// kernel: tpu_custom_call.1
$region0: #{tpu_custom_call.1}
  #allocation0 [shape = 'u32[]', space=smem, size = 0x4, offset = 0x4, fixed_abs, tag = 'smem constant byte address 0x4 - core index']
  #allocation1 [shape = 'u32[144,128]{1,0:T(1,128)}', space=vmem, size = 0x12000, scoped, tag = 'internal scratch']
  %s0 = inlined_call_operand.vmem [shape: f32[32,32], index: 0, kind: input, shape index: {}]
  %s1 = inlined_call_operand.vmem [shape: f32[32,64], index: 1, kind: input, shape index: {}]
  %s2 = inlined_call_operand.hbm [shape: f32[64,512], index: 2, kind: input, shape index: {}]
  %s3 = inlined_call_operand.vmem [shape: bf16[32,512], index: 3, kind: input, shape index: {}]
  %s4 = inlined_call_operand.vmem [shape: bf16[256,64], index: 4, kind: input, shape index: {}]
  %s5 = inlined_call_operand.vmem [shape: f32[1,64], index: 5, kind: input, shape index: {}]
  %s6 = inlined_call_operand.hbm [shape: f32[32,64], index: 6, kind: output, shape index: {}]
  %s7 = sld [smem:[#allocation0]]
  $region38: #{tpu_custom_call.1} parent=0
    _
  %s9 = ssub.s32 1, %s7
  %s10 = scalar_select 0, %s9, %s7
  $region1: #{tpu_custom_call.1} parent=0
    #allocation2 [shape = 'u8[131072]{0}', space=vmem, size = 0x20000, scoped, tag = 'input window, operand 2, single buffered']
    #allocation3 [shape = 's32[1]{0}', space=sflag, size = 0x4, scoped, tag = 'scoped memory for tpu_custom_call.1']
    #allocation4 [shape = 's32[1]{0}', space=sflag, size = 0x4, scoped, tag = 'scoped memory for tpu_custom_call.1']
    #allocation5 [shape = 'u8[16384]{0}', space=vmem, size = 0x4000, scoped, tag = 'output window, operand 0, single buffered']
    %11 = vsyncpa [#allocation3], 0
    %12 = vsyncpa [#allocation4], 0
    // Predicated region
    $region2: #{tpu_custom_call.1} parent=1 // pred_check
      _
    $region3: #{tpu_custom_call.1} parent=1 // pred_check_branch
      %14 = sbr.rel (0) target = $region5
    $region4: #{tpu_custom_call.1} parent=1 // pred_region
      _
    $region5: #{tpu_custom_call.1} parent=1 // pred_fallthru
      _
    // Predicated region
    $region6: #{tpu_custom_call.1} parent=1 // pred_check
      _
    $region7: #{tpu_custom_call.1} parent=1 // pred_check_branch
      %16 = sbr.rel (0) target = $region9
    $region8: #{tpu_custom_call.1} parent=1 // pred_region
      _
    $region9: #{tpu_custom_call.1} parent=1 // pred_fallthru
      _
    // Predicated region
    $region10: #{tpu_custom_call.1} parent=1 // pred_check
      _
    $region11: #{tpu_custom_call.1} parent=1 // pred_check_branch
      %18 = sbr.rel (0) target = $region13
    $region12: #{tpu_custom_call.1} parent=1 // pred_region
      %s20 = ssub.s32 4096, 4096
      %21 = vsyncadd [#allocation3], %s20
      %s22 = sshll.u32 [#allocation2], 4
      %s23 = int_to_ptr.vmem [resolvable:$true] %s22
      %28 = dma.hbm_to_vmem [thread:$0]  %s2, 4096, %s23, [#allocation3], 512, 512, 32
    $region13: #{tpu_custom_call.1} parent=1 // pred_fallthru
      _
    // Predicated region
    $region14: #{tpu_custom_call.1} parent=1 // pred_check
      _
    $region15: #{tpu_custom_call.1} parent=1 // pred_check_branch
      %30 = sbr.rel (0) target = $region17
    $region16: #{tpu_custom_call.1} parent=1 // pred_region
      _
    $region17: #{tpu_custom_call.1} parent=1 // pred_fallthru
      _
    // Predicated region
    $region18: #{tpu_custom_call.1} parent=1 // pred_check
      _
    $region19: #{tpu_custom_call.1} parent=1 // pred_check_branch
      %32 = sbr.rel (0) target = $region21
    $region20: #{tpu_custom_call.1} parent=1 // pred_region
      _
    $region21: #{tpu_custom_call.1} parent=1 // pred_fallthru
      _
    // Predicated region
    $region22: #{tpu_custom_call.1} parent=1 // pred_check
      _
    $region23: #{tpu_custom_call.1} parent=1 // pred_check_branch
      %34 = sbr.rel (0) target = $region25
    $region24: #{tpu_custom_call.1} parent=1 // pred_region
      _
    $region25: #{tpu_custom_call.1} parent=1 // pred_fallthru
      _
    // Predicated region
    $region26: #{tpu_custom_call.1} parent=1 // pred_check
      _
    $region27: #{tpu_custom_call.1} parent=1 // pred_check_branch
      %36 = sbr.rel (0) target = $region29
    $region28: #{tpu_custom_call.1} parent=1 // pred_region
      %37 = dma.done [#allocation3], 4096
    $region29: #{tpu_custom_call.1} parent=1 // pred_fallthru
      _
    %v38 = vld [vmem:[%s0] sm:$0xff]
    %v39 = vld [vmem:[%s0 + $0x8] sm:$0xff]
    %v40 = vld [vmem:[%s0 + $0x10] sm:$0xff]
    %v41 = vld [vmem:[%s0 + $0x18] sm:$0xff]
    %v42 = vld [vmem:[%s1] sm:$0xff]
    %v43 = vld [vmem:[%s1 + $0x8] sm:$0xff]
    %v44 = vld [vmem:[%s1 + $0x10] sm:$0xff]
    %v45 = vld [vmem:[%s1 + $0x18] sm:$0xff]
    %vm46 = vcmask 261120
    %v48 = vsel %vm46, %v38, 0
    %v51 = vsel %vm46, %v39, 0
    %v54 = vsel %vm46, %v40, 0
    %v57 = vsel %vm46, %v41, 0
    %59 = vmatprep.subr.mxu0 0.0
    %60 = vmatpush1.msra.mxu0 %v42
    %61 = vmatprep.subr.mxu0 0.0
    %62 = vmatpush1.msra.mxu0 %v43
    %63 = vmatprep.subr.mxu0 0.0
    %64 = vmatpush1.msra.mxu0 %v44
    %65 = vmatprep.subr.mxu0 0.0
    %66 = vmatpush1.msra.mxu0 %v45
    %67 = vmatprep.subr.mxu0 0.0
    %68 = vmatpush1.msra.mxu0 0.0
    %69 = vmatprep.subr.mxu0 0.0
    %70 = vmatpush1.msra.mxu0 0.0
    %71 = vmatprep.subr.mxu0 0.0
    %72 = vmatpush1.msra.mxu0 0.0
    %73 = vmatprep.subr.mxu0 0.0
    %74 = vmatpush1.msra.mxu0 0.0
    %75 = vmatprep.subr.mxu0 0.0
    %76 = vmatpush1.msra.mxu0 0.0
    %77 = vmatprep.subr.mxu0 0.0
    %78 = vmatpush1.msra.mxu0 0.0
    %79 = vmatprep.subr.mxu0 0.0
    %80 = vmatpush1.msra.mxu0 0.0
    %81 = vmatprep.subr.mxu0 0.0
    %82 = vmatpush1.msra.mxu0 0.0
    %83 = vmatprep.subr.mxu0 0.0
    %84 = vmatpush1.msra.mxu0 0.0
    %85 = vmatprep.subr.mxu0 0.0
    %86 = vmatpush1.msra.mxu0 0.0
    %87 = vmatprep.subr.mxu0 0.0
    %88 = vmatpush1.msra.mxu0 0.0
    %89 = vmatprep.subr.mxu0 0.0
    %90 = vmatpush1.msra.mxu0 0.0
    %91 = vmatprep.subr.mxu0 0.0
    %92 = vmatpush1.msra.mxu0 0.0
    %93 = vmatprep.subr.mxu0 0.0
    %94 = vmatpush1.msra.mxu0 0.0
    %95 = vmatprep.subr.mxu0 0.0
    %96 = vmatpush1.msra.mxu0 0.0
    %97 = vmatprep.subr.mxu0 0.0
    %98 = vmatpush1.msra.mxu0 0.0
    %99 = vmatprep.subr.mxu0 0.0
    %100 = vmatpush1.msra.mxu0 0.0
    %101 = vmatprep.subr.mxu0 0.0
    %102 = vmatpush1.msra.mxu0 0.0
    %103 = vmatprep.subr.mxu0 0.0
    %104 = vmatpush1.msra.mxu0 0.0
    %105 = vmatprep.subr.mxu0 0.0
    %106 = vmatpush1.msra.mxu0 0.0
    %107 = vmatprep.subr.mxu0 0.0
    %108 = vmatpush1.msra.mxu0 0.0
    %109 = vmatprep.subr.mxu0 0.0
    %110 = vmatpush1.msra.mxu0 0.0
    %111 = vmatprep.subr.mxu0 0.0
    %112 = vmatpush1.msra.mxu0 0.0
    %113 = vmatprep.subr.mxu0 0.0
    %114 = vmatpush1.msra.mxu0 0.0
    %115 = vmatprep.subr.mxu0 0.0
    %116 = vmatpush1.msra.mxu0 0.0
    %117 = vmatprep.subr.mxu0 0.0
    %118 = vmatpush1.msra.mxu0 0.0
    %119 = vmatprep.subr.mxu0 0.0
    %120 = vmatpush1.msra.mxu0 0.0
    %121 = vmatprep.subr.mxu0 0.0
    %122 = vmatpush1.msra.mxu0 0.0
    %123 = vmatprep.mubr.f32.mxu0 0.0
    %124 = vmatmul.mubr.f32.gmra.mrb[0].mxu0 %v48
    %v125 = vpop.f32.mrb[0].mxu0
    %v126 = vadd.f32 0.0, %v125
    %v127 = vpop.f32.mrb[0].mxu0
    %128 = vmatprep.mubr.f32.mxu0 0.0
    %129 = vmatmul.mubr.f32.gmra.mrb[0].mxu0 %v51
    %v130 = vpop.f32.mrb[0].mxu0
    %v131 = vadd.f32 0.0, %v130
    %v132 = vpop.f32.mrb[0].mxu0
    %133 = vmatprep.mubr.f32.mxu0 0.0
    %134 = vmatmul.mubr.f32.gmra.mrb[0].mxu0 %v54
    %v135 = vpop.f32.mrb[0].mxu0
    %v136 = vadd.f32 0.0, %v135
    %v137 = vpop.f32.mrb[0].mxu0
    %138 = vmatprep.mubr.f32.mxu0 0.0
    %139 = vmatmul.mubr.f32.gmra.mrb[0].mxu0 %v57
    %v140 = vpop.f32.mrb[0].mxu0
    %v141 = vadd.f32 0.0, %v140
    %v142 = vpop.f32.mrb[0].mxu0
    %143 = vdwg.mxu0
    %v144 = vld [vmem:[#allocation2] sm:$0xff]
    %v145 = vld [vmem:[#allocation2 + $0x8] sm:$0xff]
    %v146 = vld [vmem:[#allocation2 + $0x10] sm:$0xff]
    %v147 = vld [vmem:[#allocation2 + $0x18] sm:$0xff]
    %v148 = vld [vmem:[#allocation2 + $0x20] sm:$0xff]
    %v149 = vld [vmem:[#allocation2 + $0x28] sm:$0xff]
    %v150 = vld [vmem:[#allocation2 + $0x30] sm:$0xff]
    %v151 = vld [vmem:[#allocation2 + $0x38] sm:$0xff]
    %v152 = vld [vmem:[#allocation2 + $0x40] sm:$0xff]
    %v153 = vld [vmem:[#allocation2 + $0x48] sm:$0xff]
    %v154 = vld [vmem:[#allocation2 + $0x50] sm:$0xff]
    %v155 = vld [vmem:[#allocation2 + $0x58] sm:$0xff]
    %v156 = vld [vmem:[#allocation2 + $0x60] sm:$0xff]
    %v157 = vld [vmem:[#allocation2 + $0x68] sm:$0xff]
    %v158 = vld [vmem:[#allocation2 + $0x70] sm:$0xff]
    %v159 = vld [vmem:[#allocation2 + $0x78] sm:$0xff]
    %v160 = vld [vmem:[#allocation2 + $0x80] sm:$0xff]
    %v161 = vld [vmem:[#allocation2 + $0x88] sm:$0xff]
    %v162 = vld [vmem:[#allocation2 + $0x90] sm:$0xff]
    %v163 = vld [vmem:[#allocation2 + $0x98] sm:$0xff]
    %v164 = vld [vmem:[#allocation2 + $0xa0] sm:$0xff]
    %v165 = vld [vmem:[#allocation2 + $0xa8] sm:$0xff]
    %v166 = vld [vmem:[#allocation2 + $0xb0] sm:$0xff]
    %v167 = vld [vmem:[#allocation2 + $0xb8] sm:$0xff]
    %v168 = vld [vmem:[#allocation2 + $0xc0] sm:$0xff]
    %v169 = vld [vmem:[#allocation2 + $0xc8] sm:$0xff]
    %v170 = vld [vmem:[#allocation2 + $0xd0] sm:$0xff]
    %v171 = vld [vmem:[#allocation2 + $0xd8] sm:$0xff]
    %v172 = vld [vmem:[#allocation2 + $0xe0] sm:$0xff]
    %v173 = vld [vmem:[#allocation2 + $0xe8] sm:$0xff]
    %v174 = vld [vmem:[#allocation2 + $0xf0] sm:$0xff]
    %v175 = vld [vmem:[#allocation2 + $0xf8] sm:$0xff]
    %vm176 = vcmask 523264
    %v178 = vsel %vm176, %v126, 0
    %v181 = vsel %vm176, %v131, 0
    %v184 = vsel %vm176, %v136, 0
    %v187 = vsel %vm176, %v141, 0
    %189 = vmatprep.subr.mxu0 %v145
    %190 = vmatpush1.msra.mxu0 %v144
    %191 = vmatprep.subr.mxu0 %v149
    %192 = vmatpush1.msra.mxu0 %v148
    %193 = vmatprep.subr.mxu0 %v153
    %194 = vmatpush1.msra.mxu0 %v152
    %195 = vmatprep.subr.mxu0 %v157
    %196 = vmatpush1.msra.mxu0 %v156
    %197 = vmatprep.subr.mxu0 %v161
    %198 = vmatpush1.msra.mxu0 %v160
    %199 = vmatprep.subr.mxu0 %v165
    %200 = vmatpush1.msra.mxu0 %v164
    %201 = vmatprep.subr.mxu0 %v169
    %202 = vmatpush1.msra.mxu0 %v168
    %203 = vmatprep.subr.mxu0 %v173
    %204 = vmatpush1.msra.mxu0 %v172
    %205 = vmatprep.subr.mxu0 0.0
    %206 = vmatpush1.msra.mxu0 0.0
    %207 = vmatprep.subr.mxu0 0.0
    %208 = vmatpush1.msra.mxu0 0.0
    %209 = vmatprep.subr.mxu0 0.0
    %210 = vmatpush1.msra.mxu0 0.0
    %211 = vmatprep.subr.mxu0 0.0
    %212 = vmatpush1.msra.mxu0 0.0
    %213 = vmatprep.subr.mxu0 0.0
    %214 = vmatpush1.msra.mxu0 0.0
    %215 = vmatprep.subr.mxu0 0.0
    %216 = vmatpush1.msra.mxu0 0.0
    %217 = vmatprep.subr.mxu0 0.0
    %218 = vmatpush1.msra.mxu0 0.0
    %219 = vmatprep.subr.mxu0 0.0
    %220 = vmatpush1.msra.mxu0 0.0
    %221 = vmatprep.subr.mxu0 0.0
    %222 = vmatpush1.msra.mxu0 0.0
    %223 = vmatprep.subr.mxu0 0.0
    %224 = vmatpush1.msra.mxu0 0.0
    %225 = vmatprep.subr.mxu0 0.0
    %226 = vmatpush1.msra.mxu0 0.0
    %227 = vmatprep.subr.mxu0 0.0
    %228 = vmatpush1.msra.mxu0 0.0
    %229 = vmatprep.subr.mxu0 0.0
    %230 = vmatpush1.msra.mxu0 0.0
    %231 = vmatprep.subr.mxu0 0.0
    %232 = vmatpush1.msra.mxu0 0.0
    %233 = vmatprep.subr.mxu0 0.0
    %234 = vmatpush1.msra.mxu0 0.0
    %235 = vmatprep.subr.mxu0 0.0
    %236 = vmatpush1.msra.mxu0 0.0
    %237 = vmatprep.subr.mxu0 0.0
    %238 = vmatpush1.msra.mxu0 0.0
    %239 = vmatprep.subr.mxu0 0.0
    %240 = vmatpush1.msra.mxu0 0.0
    %241 = vmatprep.subr.mxu0 0.0
    %242 = vmatpush1.msra.mxu0 0.0
    %243 = vmatprep.subr.mxu0 0.0
    %244 = vmatpush1.msra.mxu0 0.0
    %245 = vmatprep.subr.mxu0 0.0
    %246 = vmatpush1.msra.mxu0 0.0
    %247 = vmatprep.subr.mxu0 0.0
    %248 = vmatpush1.msra.mxu0 0.0
    %249 = vmatprep.subr.mxu0 0.0
    %250 = vmatpush1.msra.mxu0 0.0
    %251 = vmatprep.subr.mxu0 0.0
    %252 = vmatpush1.msra.mxu0 0.0
    %253 = vmatprep.mubr.f32.mxu0 0.0
    %254 = vmatmul.mubr.f32.gmra.mrb[0].mxu0 %v178
    %v255 = vpop.f32.mrb[0].mxu0
    %v256 = vadd.f32 0.0, %v255
    %v257 = vpop.f32.mrb[0].mxu0
    %v258 = vadd.f32 0.0, %v257
    %259 = vmatprep.mubr.f32.mxu0 0.0
    %260 = vmatmul.mubr.f32.gmra.mrb[0].mxu0 %v181
    %v261 = vpop.f32.mrb[0].mxu0
    %v262 = vadd.f32 0.0, %v261
    %v263 = vpop.f32.mrb[0].mxu0
    %v264 = vadd.f32 0.0, %v263
    %265 = vmatprep.mubr.f32.mxu0 0.0
    %266 = vmatmul.mubr.f32.gmra.mrb[0].mxu0 %v184
    %v267 = vpop.f32.mrb[0].mxu0
    %v268 = vadd.f32 0.0, %v267
    %v269 = vpop.f32.mrb[0].mxu0
    %v270 = vadd.f32 0.0, %v269
    %271 = vmatprep.mubr.f32.mxu0 0.0
    %272 = vmatmul.mubr.f32.gmra.mrb[0].mxu0 %v187
    %v273 = vpop.f32.mrb[0].mxu0
    %v274 = vadd.f32 0.0, %v273
    %v275 = vpop.f32.mrb[0].mxu0
    %v276 = vadd.f32 0.0, %v275
    %277 = vdwg.mxu0
    %278 = vmatprep.subr.mxu0 %v147
    %279 = vmatpush1.msra.mxu0 %v146
    %280 = vmatprep.subr.mxu0 %v151
    %281 = vmatpush1.msra.mxu0 %v150
    %282 = vmatprep.subr.mxu0 %v155
    %283 = vmatpush1.msra.mxu0 %v154
    %284 = vmatprep.subr.mxu0 %v159
    %285 = vmatpush1.msra.mxu0 %v158
    %286 = vmatprep.subr.mxu0 %v163
    %287 = vmatpush1.msra.mxu0 %v162
    %288 = vmatprep.subr.mxu0 %v167
    %289 = vmatpush1.msra.mxu0 %v166
    %290 = vmatprep.subr.mxu0 %v171
    %291 = vmatpush1.msra.mxu0 %v170
    %292 = vmatprep.subr.mxu0 %v175
    %293 = vmatpush1.msra.mxu0 %v174
    %294 = vmatprep.subr.mxu0 0.0
    %295 = vmatpush1.msra.mxu0 0.0
    %296 = vmatprep.subr.mxu0 0.0
    %297 = vmatpush1.msra.mxu0 0.0
    %298 = vmatprep.subr.mxu0 0.0
    %299 = vmatpush1.msra.mxu0 0.0
    %300 = vmatprep.subr.mxu0 0.0
    %301 = vmatpush1.msra.mxu0 0.0
    %302 = vmatprep.subr.mxu0 0.0
    %303 = vmatpush1.msra.mxu0 0.0
    %304 = vmatprep.subr.mxu0 0.0
    %305 = vmatpush1.msra.mxu0 0.0
    %306 = vmatprep.subr.mxu0 0.0
    %307 = vmatpush1.msra.mxu0 0.0
    %308 = vmatprep.subr.mxu0 0.0
    %309 = vmatpush1.msra.mxu0 0.0
    %310 = vmatprep.subr.mxu0 0.0
    %311 = vmatpush1.msra.mxu0 0.0
    %312 = vmatprep.subr.mxu0 0.0
    %313 = vmatpush1.msra.mxu0 0.0
    %314 = vmatprep.subr.mxu0 0.0
    %315 = vmatpush1.msra.mxu0 0.0
    %316 = vmatprep.subr.mxu0 0.0
    %317 = vmatpush1.msra.mxu0 0.0
    %318 = vmatprep.subr.mxu0 0.0
    %319 = vmatpush1.msra.mxu0 0.0
    %320 = vmatprep.subr.mxu0 0.0
    %321 = vmatpush1.msra.mxu0 0.0
    %322 = vmatprep.subr.mxu0 0.0
    %323 = vmatpush1.msra.mxu0 0.0
    %324 = vmatprep.subr.mxu0 0.0
    %325 = vmatpush1.msra.mxu0 0.0
    %326 = vmatprep.subr.mxu0 0.0
    %327 = vmatpush1.msra.mxu0 0.0
    %328 = vmatprep.subr.mxu0 0.0
    %329 = vmatpush1.msra.mxu0 0.0
    %330 = vmatprep.subr.mxu0 0.0
    %331 = vmatpush1.msra.mxu0 0.0
    %332 = vmatprep.subr.mxu0 0.0
    %333 = vmatpush1.msra.mxu0 0.0
    %334 = vmatprep.subr.mxu0 0.0
    %335 = vmatpush1.msra.mxu0 0.0
    %336 = vmatprep.subr.mxu0 0.0
    %337 = vmatpush1.msra.mxu0 0.0
    %338 = vmatprep.subr.mxu0 0.0
    %339 = vmatpush1.msra.mxu0 0.0
    %340 = vmatprep.subr.mxu0 0.0
    %341 = vmatpush1.msra.mxu0 0.0
    %342 = vmatprep.mubr.f32.mxu0 0.0
    %343 = vmatmul.mubr.f32.gmra.mrb[0].mxu0 %v178
    %v344 = vpop.f32.mrb[0].mxu0
    %v345 = vadd.f32 0.0, %v344
    %v346 = vpop.f32.mrb[0].mxu0
    %v347 = vadd.f32 0.0, %v346
    %348 = vmatprep.mubr.f32.mxu0 0.0
    %349 = vmatmul.mubr.f32.gmra.mrb[0].mxu0 %v181
    %v350 = vpop.f32.mrb[0].mxu0
    %v351 = vadd.f32 0.0, %v350
    %v352 = vpop.f32.mrb[0].mxu0
    %v353 = vadd.f32 0.0, %v352
    %354 = vmatprep.mubr.f32.mxu0 0.0
    %355 = vmatmul.mubr.f32.gmra.mrb[0].mxu0 %v184
    %v356 = vpop.f32.mrb[0].mxu0
    %v357 = vadd.f32 0.0, %v356
    %v358 = vpop.f32.mrb[0].mxu0
    %v359 = vadd.f32 0.0, %v358
    %360 = vmatprep.mubr.f32.mxu0 0.0
    %361 = vmatmul.mubr.f32.gmra.mrb[0].mxu0 %v187
    %v362 = vpop.f32.mrb[0].mxu0
    %v363 = vadd.f32 0.0, %v362
    %v364 = vpop.f32.mrb[0].mxu0
    %v365 = vadd.f32 0.0, %v364
    %366 = vdwg.mxu0
    %v367 = vld [vmem:[%s3] sm:$0xff]
    %v368 = vld [vmem:[%s3 + $0x10] sm:$0xff]
    %v369 = vld [vmem:[%s3 + $0x20] sm:$0xff]
    %v370 = vld [vmem:[%s3 + $0x30] sm:$0xff]
    %v371 = vld [vmem:[%s3 + $0x8] sm:$0xff]
    %v372 = vld [vmem:[%s3 + $0x18] sm:$0xff]
    %v373 = vld [vmem:[%s3 + $0x28] sm:$0xff]
    %v374 = vld [vmem:[%s3 + $0x38] sm:$0xff]
    %v375 = vunpack.c.l.bf16 %v367
    %v376 = vunpack.c.h.bf16 %v367
    %v377 = vunpack.c.l.bf16 %v368
    %v378 = vunpack.c.h.bf16 %v368
    %v379 = vunpack.c.l.bf16 %v369
    %v380 = vunpack.c.h.bf16 %v369
    %v381 = vunpack.c.l.bf16 %v370
    %v382 = vunpack.c.h.bf16 %v370
    %v383 = vmul.f32 %v345, %v375
    %v384 = vmul.f32 %v347, %v376
    %v385 = vmul.f32 %v351, %v377
    %v386 = vmul.f32 %v353, %v378
    %v387 = vmul.f32 %v357, %v379
    %v388 = vmul.f32 %v359, %v380
    %v389 = vmul.f32 %v363, %v381
    %v390 = vmul.f32 %v365, %v382
    %v391 = vadd.f32 %v383, %v385
    %v392 = vadd.f32 %v391, %v387
    %v393 = vadd.f32 %v392, %v389
    %v394 = vrot.slane %v393, 4
    %v395 = vadd.f32 %v393, %v394
    %v396 = vrot.slane %v395, 2
    %v397 = vadd.f32 %v395, %v396
    %v398 = vrot.slane %v397, 1
    %v399 = vadd.f32 %v397, %v398
    %v400 = vadd.f32 %v384, %v386
    %v401 = vadd.f32 %v400, %v388
    %v402 = vadd.f32 %v401, %v390
    %v403 = vrot.slane %v402, 4
    %v404 = vadd.f32 %v402, %v403
    %v405 = vrot.slane %v404, 2
    %v406 = vadd.f32 %v404, %v405
    %v407 = vrot.slane %v406, 1
    %v408 = vadd.f32 %v406, %v407
    %v409 = vadd.f32 %v256, %v399
    %v410 = vadd.f32 %v258, %v408
    %v411 = vadd.f32 %v262, %v399
    %v412 = vadd.f32 %v264, %v408
    %v413 = vadd.f32 %v268, %v399
    %v414 = vadd.f32 %v270, %v408
    %v415 = vadd.f32 %v274, %v399
    %v416 = vadd.f32 %v276, %v408
    %vm417 = vcmp.gt.f32.partialorder %v409, 0.0
    %vm418 = vcmp.gt.f32.partialorder %v410, 0.0
    %vm419 = vcmp.gt.f32.partialorder %v411, 0.0
    %vm420 = vcmp.gt.f32.partialorder %v412, 0.0
    %vm421 = vcmp.gt.f32.partialorder %v413, 0.0
    %vm422 = vcmp.gt.f32.partialorder %v414, 0.0
    %vm423 = vcmp.gt.f32.partialorder %v415, 0.0
    %vm424 = vcmp.gt.f32.partialorder %v416, 0.0
    %v425 = vmul.f32 %v409, 0.2
    %v426 = vmul.f32 %v410, 0.2
    %v427 = vmul.f32 %v411, 0.2
    %v428 = vmul.f32 %v412, 0.2
    %v429 = vmul.f32 %v413, 0.2
    %v430 = vmul.f32 %v414, 0.2
    %v431 = vmul.f32 %v415, 0.2
    %v432 = vmul.f32 %v416, 0.2
    %v433 = vsel %vm417, %v409, %v425
    %v434 = vsel %vm418, %v410, %v426
    %v435 = vsel %vm419, %v411, %v427
    %v436 = vsel %vm420, %v412, %v428
    %v437 = vsel %vm421, %v413, %v429
    %v438 = vsel %vm422, %v414, %v430
    %v439 = vsel %vm423, %v415, %v431
    %v440 = vsel %vm424, %v416, %v432
    %v441 = vunpack.c.l.bf16 %v371
    %v442 = vunpack.c.h.bf16 %v371
    %v443 = vunpack.c.l.bf16 %v372
    %v444 = vunpack.c.h.bf16 %v372
    %v445 = vunpack.c.l.bf16 %v373
    %v446 = vunpack.c.h.bf16 %v373
    %v447 = vunpack.c.l.bf16 %v374
    %v448 = vunpack.c.h.bf16 %v374
    %v449 = vadd.f32 %v433, %v441
    %v450 = vadd.f32 %v434, %v442
    %v451 = vadd.f32 %v435, %v443
    %v452 = vadd.f32 %v436, %v444
    %v453 = vadd.f32 %v437, %v445
    %v454 = vadd.f32 %v438, %v446
    %v455 = vadd.f32 %v439, %v447
    %v456 = vadd.f32 %v440, %v448
    %v457 = vmax.f32 %v449, %v450
    %458 = vmax.xlane.f32.xlu0 %v457
    %v459 = vpop.xlane.xlu0 %458
    %v460 = vmax.f32 %v451, %v452
    %461 = vmax.xlane.f32.xlu0 %v460
    %v462 = vpop.xlane.xlu0 %461
    %v463 = vmax.f32 %v453, %v454
    %464 = vmax.xlane.f32.xlu0 %v463
    %v465 = vpop.xlane.xlu0 %464
    %v466 = vmax.f32 %v455, %v456
    %467 = vmax.xlane.f32.xlu0 %v466
    %v468 = vpop.xlane.xlu0 %467
    %v469 = vsub.f32 %v449, %v459
    %v470 = vsub.f32 %v450, %v459
    %v471 = vsub.f32 %v451, %v462
    %v472 = vsub.f32 %v452, %v462
    %v473 = vsub.f32 %v453, %v465
    %v474 = vsub.f32 %v454, %v465
    %v475 = vsub.f32 %v455, %v468
    %v476 = vsub.f32 %v456, %v468
    %v477 = vmul.f32 %v469, 1.442695
    %v478 = vpow.pop %v477
    %v479 = vmul.f32 %v470, 1.442695
    %v480 = vpow.pop %v479
    %v481 = vmul.f32 %v471, 1.442695
    %v482 = vpow.pop %v481
    %v483 = vmul.f32 %v472, 1.442695
    %v484 = vpow.pop %v483
    %v485 = vmul.f32 %v473, 1.442695
    %v486 = vpow.pop %v485
    %v487 = vmul.f32 %v474, 1.442695
    %v488 = vpow.pop %v487
    %v489 = vmul.f32 %v475, 1.442695
    %v490 = vpow.pop %v489
    %v491 = vmul.f32 %v476, 1.442695
    %v492 = vpow.pop %v491
    %v493 = vld [vmem:[%s4] sm:$0xf]
    %v494 = vld [vmem:[%s4 + $0x4] sm:$0xf]
    %v495 = vld [vmem:[%s4 + $0x8] sm:$0xf]
    %v496 = vld [vmem:[%s4 + $0xc] sm:$0xf]
    %v497 = vld [vmem:[%s4 + $0x10] sm:$0xf]
    %v498 = vld [vmem:[%s4 + $0x14] sm:$0xf]
    %v499 = vld [vmem:[%s4 + $0x18] sm:$0xf]
    %v500 = vld [vmem:[%s4 + $0x1c] sm:$0xf]
    %v501 = vld [vmem:[%s4 + $0x20] sm:$0xf]
    %v502 = vld [vmem:[%s4 + $0x24] sm:$0xf]
    %v503 = vld [vmem:[%s4 + $0x28] sm:$0xf]
    %v504 = vld [vmem:[%s4 + $0x2c] sm:$0xf]
    %v505 = vld [vmem:[%s4 + $0x30] sm:$0xf]
    %v506 = vld [vmem:[%s4 + $0x34] sm:$0xf]
    %v507 = vld [vmem:[%s4 + $0x38] sm:$0xf]
    %v508 = vld [vmem:[%s4 + $0x3c] sm:$0xf]
    %v509 = vld [vmem:[%s4 + $0x40] sm:$0xf]
    %v510 = vld [vmem:[%s4 + $0x44] sm:$0xf]
    %v511 = vld [vmem:[%s4 + $0x48] sm:$0xf]
    %v512 = vld [vmem:[%s4 + $0x4c] sm:$0xf]
    %v513 = vld [vmem:[%s4 + $0x50] sm:$0xf]
    %v514 = vld [vmem:[%s4 + $0x54] sm:$0xf]
    %v515 = vld [vmem:[%s4 + $0x58] sm:$0xf]
    %v516 = vld [vmem:[%s4 + $0x5c] sm:$0xf]
    %v517 = vld [vmem:[%s4 + $0x60] sm:$0xf]
    %v518 = vld [vmem:[%s4 + $0x64] sm:$0xf]
    %v519 = vld [vmem:[%s4 + $0x68] sm:$0xf]
    %v520 = vld [vmem:[%s4 + $0x6c] sm:$0xf]
    %v521 = vld [vmem:[%s4 + $0x70] sm:$0xf]
    %v522 = vld [vmem:[%s4 + $0x74] sm:$0xf]
    %v523 = vld [vmem:[%s4 + $0x78] sm:$0xf]
    %v524 = vld [vmem:[%s4 + $0x7c] sm:$0xf]
    %v525 = vunpack.c.l.bf16 %v493
    %v526 = vunpack.c.l.bf16 %v494
    %v527 = vunpack.c.l.bf16 %v495
    %v528 = vunpack.c.l.bf16 %v496
    %v529 = vunpack.c.l.bf16 %v497
    %v530 = vunpack.c.l.bf16 %v498
    %v531 = vunpack.c.l.bf16 %v499
    %v532 = vunpack.c.l.bf16 %v500
    %v533 = vunpack.c.l.bf16 %v501
    %v534 = vunpack.c.l.bf16 %v502
    %v535 = vunpack.c.l.bf16 %v503
    %v536 = vunpack.c.l.bf16 %v504
    %v537 = vunpack.c.l.bf16 %v505
    %v538 = vunpack.c.l.bf16 %v506
    %v539 = vunpack.c.l.bf16 %v507
    %v540 = vunpack.c.l.bf16 %v508
    %v541 = vunpack.c.l.bf16 %v509
    %v542 = vunpack.c.l.bf16 %v510
    %v543 = vunpack.c.l.bf16 %v511
    %v544 = vunpack.c.l.bf16 %v512
    %v545 = vunpack.c.l.bf16 %v513
    %v546 = vunpack.c.l.bf16 %v514
    %v547 = vunpack.c.l.bf16 %v515
    %v548 = vunpack.c.l.bf16 %v516
    %v549 = vunpack.c.l.bf16 %v517
    %v550 = vunpack.c.l.bf16 %v518
    %v551 = vunpack.c.l.bf16 %v519
    %v552 = vunpack.c.l.bf16 %v520
    %v553 = vunpack.c.l.bf16 %v521
    %v554 = vunpack.c.l.bf16 %v522
    %v555 = vunpack.c.l.bf16 %v523
    %v556 = vunpack.c.l.bf16 %v524
    %v557 = vmul.f32 %v126, %v525
    %v558 = vmul.f32 %v131, %v526
    %v559 = vmul.f32 %v136, %v527
    %v560 = vmul.f32 %v141, %v528
    %v561 = vmul.f32 %v126, %v529
    %v562 = vmul.f32 %v131, %v530
    %v563 = vmul.f32 %v136, %v531
    %v564 = vmul.f32 %v141, %v532
    %v565 = vmul.f32 %v126, %v533
    %v566 = vmul.f32 %v131, %v534
    %v567 = vmul.f32 %v136, %v535
    %v568 = vmul.f32 %v141, %v536
    %v569 = vmul.f32 %v126, %v537
    %v570 = vmul.f32 %v131, %v538
    %v571 = vmul.f32 %v136, %v539
    %v572 = vmul.f32 %v141, %v540
    %v573 = vmul.f32 %v126, %v541
    %v574 = vmul.f32 %v131, %v542
    %v575 = vmul.f32 %v136, %v543
    %v576 = vmul.f32 %v141, %v544
    %v577 = vmul.f32 %v126, %v545
    %v578 = vmul.f32 %v131, %v546
    %v579 = vmul.f32 %v136, %v547
    %v580 = vmul.f32 %v141, %v548
    %v581 = vmul.f32 %v126, %v549
    %v582 = vmul.f32 %v131, %v550
    %v583 = vmul.f32 %v136, %v551
    %v584 = vmul.f32 %v141, %v552
    %v585 = vmul.f32 %v126, %v553
    %v586 = vmul.f32 %v131, %v554
    %v587 = vmul.f32 %v136, %v555
    %v588 = vmul.f32 %v141, %v556
    %621 = vrot.lane.b32.xlu0 %v525, 64
    %v622 = vpop.permute.xlu0 %621
    %623 = vrot.lane.b32.xlu0 %v526, 64
    %v624 = vpop.permute.xlu0 %623
    %625 = vrot.lane.b32.xlu0 %v527, 64
    %v626 = vpop.permute.xlu0 %625
    %627 = vrot.lane.b32.xlu0 %v528, 64
    %v628 = vpop.permute.xlu0 %627
    %629 = vrot.lane.b32.xlu0 %v529, 64
    %v630 = vpop.permute.xlu0 %629
    %631 = vrot.lane.b32.xlu0 %v530, 64
    %v632 = vpop.permute.xlu0 %631
    %633 = vrot.lane.b32.xlu0 %v531, 64
    %v634 = vpop.permute.xlu0 %633
    %635 = vrot.lane.b32.xlu0 %v532, 64
    %v636 = vpop.permute.xlu0 %635
    %637 = vrot.lane.b32.xlu0 %v533, 64
    %v638 = vpop.permute.xlu0 %637
    %639 = vrot.lane.b32.xlu0 %v534, 64
    %v640 = vpop.permute.xlu0 %639
    %641 = vrot.lane.b32.xlu0 %v535, 64
    %v642 = vpop.permute.xlu0 %641
    %643 = vrot.lane.b32.xlu0 %v536, 64
    %v644 = vpop.permute.xlu0 %643
    %645 = vrot.lane.b32.xlu0 %v537, 64
    %v646 = vpop.permute.xlu0 %645
    %647 = vrot.lane.b32.xlu0 %v538, 64
    %v648 = vpop.permute.xlu0 %647
    %649 = vrot.lane.b32.xlu0 %v539, 64
    %v650 = vpop.permute.xlu0 %649
    %651 = vrot.lane.b32.xlu0 %v540, 64
    %v652 = vpop.permute.xlu0 %651
    %653 = vrot.lane.b32.xlu0 %v541, 64
    %v654 = vpop.permute.xlu0 %653
    %655 = vrot.lane.b32.xlu0 %v542, 64
    %v656 = vpop.permute.xlu0 %655
    %657 = vrot.lane.b32.xlu0 %v543, 64
    %v658 = vpop.permute.xlu0 %657
    %659 = vrot.lane.b32.xlu0 %v544, 64
    %v660 = vpop.permute.xlu0 %659
    %661 = vrot.lane.b32.xlu0 %v545, 64
    %v662 = vpop.permute.xlu0 %661
    %663 = vrot.lane.b32.xlu0 %v546, 64
    %v664 = vpop.permute.xlu0 %663
    %665 = vrot.lane.b32.xlu0 %v547, 64
    %v666 = vpop.permute.xlu0 %665
    %667 = vrot.lane.b32.xlu0 %v548, 64
    %v668 = vpop.permute.xlu0 %667
    %669 = vrot.lane.b32.xlu0 %v549, 64
    %v670 = vpop.permute.xlu0 %669
    %671 = vrot.lane.b32.xlu0 %v550, 64
    %v672 = vpop.permute.xlu0 %671
    %673 = vrot.lane.b32.xlu0 %v551, 64
    %v674 = vpop.permute.xlu0 %673
    %675 = vrot.lane.b32.xlu0 %v552, 64
    %v676 = vpop.permute.xlu0 %675
    %677 = vrot.lane.b32.xlu0 %v553, 64
    %v678 = vpop.permute.xlu0 %677
    %679 = vrot.lane.b32.xlu0 %v554, 64
    %v680 = vpop.permute.xlu0 %679
    %681 = vrot.lane.b32.xlu0 %v555, 64
    %v682 = vpop.permute.xlu0 %681
    %683 = vrot.lane.b32.xlu0 %v556, 64
    %v684 = vpop.permute.xlu0 %683
    %v717 = vsel %vm176, %v557, %v622
    %v718 = vsel %vm176, %v558, %v624
    %v719 = vsel %vm176, %v559, %v626
    %v720 = vsel %vm176, %v560, %v628
    %v721 = vsel %vm176, %v561, %v630
    %v722 = vsel %vm176, %v562, %v632
    %v723 = vsel %vm176, %v563, %v634
    %v724 = vsel %vm176, %v564, %v636
    %v725 = vsel %vm176, %v565, %v638
    %v726 = vsel %vm176, %v566, %v640
    %v727 = vsel %vm176, %v567, %v642
    %v728 = vsel %vm176, %v568, %v644
    %v729 = vsel %vm176, %v569, %v646
    %v730 = vsel %vm176, %v570, %v648
    %v731 = vsel %vm176, %v571, %v650
    %v732 = vsel %vm176, %v572, %v652
    %v733 = vsel %vm176, %v573, %v654
    %v734 = vsel %vm176, %v574, %v656
    %v735 = vsel %vm176, %v575, %v658
    %v736 = vsel %vm176, %v576, %v660
    %v737 = vsel %vm176, %v577, %v662
    %v738 = vsel %vm176, %v578, %v664
    %v739 = vsel %vm176, %v579, %v666
    %v740 = vsel %vm176, %v580, %v668
    %v741 = vsel %vm176, %v581, %v670
    %v742 = vsel %vm176, %v582, %v672
    %v743 = vsel %vm176, %v583, %v674
    %v744 = vsel %vm176, %v584, %v676
    %v745 = vsel %vm176, %v585, %v678
    %v746 = vsel %vm176, %v586, %v680
    %v747 = vsel %vm176, %v587, %v682
    %v748 = vsel %vm176, %v588, %v684
    %749 = vmatprep.subr.mxu0 0.0
    %750 = vmatpush1.msra.mxu0 %v717
    %751 = vmatprep.subr.mxu0 0.0
    %752 = vmatpush1.msra.mxu0 %v718
    %753 = vmatprep.subr.mxu0 0.0
    %754 = vmatpush1.msra.mxu0 %v719
    %755 = vmatprep.subr.mxu0 0.0
    %756 = vmatpush1.msra.mxu0 %v720
    %757 = vmatprep.subr.mxu0 0.0
    %758 = vmatpush1.msra.mxu0 %v721
    %759 = vmatprep.subr.mxu0 0.0
    %760 = vmatpush1.msra.mxu0 %v722
    %761 = vmatprep.subr.mxu0 0.0
    %762 = vmatpush1.msra.mxu0 %v723
    %763 = vmatprep.subr.mxu0 0.0
    %764 = vmatpush1.msra.mxu0 %v724
    %765 = vmatprep.subr.mxu0 0.0
    %766 = vmatpush1.msra.mxu0 %v725
    %767 = vmatprep.subr.mxu0 0.0
    %768 = vmatpush1.msra.mxu0 %v726
    %769 = vmatprep.subr.mxu0 0.0
    %770 = vmatpush1.msra.mxu0 %v727
    %771 = vmatprep.subr.mxu0 0.0
    %772 = vmatpush1.msra.mxu0 %v728
    %773 = vmatprep.subr.mxu0 0.0
    %774 = vmatpush1.msra.mxu0 %v729
    %775 = vmatprep.subr.mxu0 0.0
    %776 = vmatpush1.msra.mxu0 %v730
    %777 = vmatprep.subr.mxu0 0.0
    %778 = vmatpush1.msra.mxu0 %v731
    %779 = vmatprep.subr.mxu0 0.0
    %780 = vmatpush1.msra.mxu0 %v732
    %781 = vmatprep.subr.mxu0 0.0
    %782 = vmatpush1.msra.mxu0 %v733
    %783 = vmatprep.subr.mxu0 0.0
    %784 = vmatpush1.msra.mxu0 %v734
    %785 = vmatprep.subr.mxu0 0.0
    %786 = vmatpush1.msra.mxu0 %v735
    %787 = vmatprep.subr.mxu0 0.0
    %788 = vmatpush1.msra.mxu0 %v736
    %789 = vmatprep.subr.mxu0 0.0
    %790 = vmatpush1.msra.mxu0 %v737
    %791 = vmatprep.subr.mxu0 0.0
    %792 = vmatpush1.msra.mxu0 %v738
    %793 = vmatprep.subr.mxu0 0.0
    %794 = vmatpush1.msra.mxu0 %v739
    %795 = vmatprep.subr.mxu0 0.0
    %796 = vmatpush1.msra.mxu0 %v740
    %797 = vmatprep.subr.mxu0 0.0
    %798 = vmatpush1.msra.mxu0 %v741
    %799 = vmatprep.subr.mxu0 0.0
    %800 = vmatpush1.msra.mxu0 %v742
    %801 = vmatprep.subr.mxu0 0.0
    %802 = vmatpush1.msra.mxu0 %v743
    %803 = vmatprep.subr.mxu0 0.0
    %804 = vmatpush1.msra.mxu0 %v744
    %805 = vmatprep.subr.mxu0 0.0
    %806 = vmatpush1.msra.mxu0 %v745
    %807 = vmatprep.subr.mxu0 0.0
    %808 = vmatpush1.msra.mxu0 %v746
    %809 = vmatprep.subr.mxu0 0.0
    %810 = vmatpush1.msra.mxu0 %v747
    %811 = vmatprep.subr.mxu0 0.0
    %812 = vmatpush1.msra.mxu0 %v748
    %813 = vmatprep.mubr.f32.mxu0 %v480
    %814 = vmatmul.mubr.f32.gmra.mrb[0].mxu0 %v478
    %v815 = vpop.f32.mrb[0].mxu0
    %v816 = vadd.f32 0.0, %v815
    %v817 = vpop.f32.mrb[0].mxu0
    %818 = vmatprep.mubr.f32.mxu0 %v484
    %819 = vmatmul.mubr.f32.gmra.mrb[0].mxu0 %v482
    %v820 = vpop.f32.mrb[0].mxu0
    %v821 = vadd.f32 0.0, %v820
    %v822 = vpop.f32.mrb[0].mxu0
    %823 = vmatprep.mubr.f32.mxu0 %v488
    %824 = vmatmul.mubr.f32.gmra.mrb[0].mxu0 %v486
    %v825 = vpop.f32.mrb[0].mxu0
    %v826 = vadd.f32 0.0, %v825
    %v827 = vpop.f32.mrb[0].mxu0
    %828 = vmatprep.mubr.f32.mxu0 %v492
    %829 = vmatmul.mubr.f32.gmra.mrb[0].mxu0 %v490
    %v830 = vpop.f32.mrb[0].mxu0
    %v831 = vadd.f32 0.0, %v830
    %v832 = vpop.f32.mrb[0].mxu0
    %833 = vdwg.mxu0
    %v834 = vmax.f32 %v816, 1e-30
    %v835 = vmax.f32 %v821, 1e-30
    %v836 = vmax.f32 %v826, 1e-30
    %v837 = vmax.f32 %v831, 1e-30
    %v838 = vrcp.pop %v834
    %v839 = vrcp.pop %v835
    %v840 = vrcp.pop %v836
    %v841 = vrcp.pop %v837
    %v842 = vmul.f32 %v834, %v838
    %v843 = vmul.f32 %v835, %v839
    %v844 = vmul.f32 %v836, %v840
    %v845 = vmul.f32 %v837, %v841
    %v846 = vsub.f32 2.0, %v842
    %v847 = vsub.f32 2.0, %v843
    %v848 = vsub.f32 2.0, %v844
    %v849 = vsub.f32 2.0, %v845
    %v850 = vmul.f32 %v838, %v846
    %v851 = vmul.f32 %v839, %v847
    %v852 = vmul.f32 %v840, %v848
    %v853 = vmul.f32 %v841, %v849
    %858 = vrot.lane.b32.xlu0 %v850, 64
    %v859 = vpop.permute.xlu0 %858
    %860 = vrot.lane.b32.xlu0 %v851, 64
    %v861 = vpop.permute.xlu0 %860
    %862 = vrot.lane.b32.xlu0 %v852, 64
    %v863 = vpop.permute.xlu0 %862
    %864 = vrot.lane.b32.xlu0 %v853, 64
    %v865 = vpop.permute.xlu0 %864
    %v870 = vmul.f32 %v816, %v859
    %v871 = vmul.f32 %v821, %v861
    %v872 = vmul.f32 %v826, %v863
    %v873 = vmul.f32 %v831, %v865
    %v874 = vld [vmem:[%s5] sm:$0x1]
    %v876 = vlaneseq
    %v877 = vshrl.u32 %v876, 7
    %v878 = vsub.s32 0, %v877
    %v879 = vrot.slane %v874, %v878
    %v881 = vadd.f32 %v870, %v879
    %v882 = vadd.f32 %v871, %v879
    %v883 = vadd.f32 %v872, %v879
    %v884 = vadd.f32 %v873, %v879
    %885 = vst.msk [vmem:[#allocation5] sm:$0xff] %vm176, %v881
    %886 = vst.msk [vmem:[#allocation5 + $0x8] sm:$0xff] %vm176, %v882
    %887 = vst.msk [vmem:[#allocation5 + $0x10] sm:$0xff] %vm176, %v883
    %888 = vst.msk [vmem:[#allocation5 + $0x18] sm:$0xff] %vm176, %v884
    // Predicated region
    $region30: #{tpu_custom_call.1} parent=1 // pred_check
      _
    $region31: #{tpu_custom_call.1} parent=1 // pred_check_branch
      %890 = sbr.rel (0) target = $region33
    $region32: #{tpu_custom_call.1} parent=1 // pred_region
      %s892 = ssub.s32 512, 512
      %893 = vsyncadd [#allocation4], %s892
      %s894 = sshll.u32 [#allocation5], 4
      %s895 = int_to_ptr.vmem [resolvable:$true] %s894
      %900 = dma.vmem_to_hbm [thread:$0]  %s895, 512, %s6, [#allocation4], 128, 128, 8
    $region33: #{tpu_custom_call.1} parent=1 // pred_fallthru
      _
    // Predicated region
    $region34: #{tpu_custom_call.1} parent=1 // pred_check
      _
    $region35: #{tpu_custom_call.1} parent=1 // pred_check_branch
      %902 = sbr.rel (0) target = $region37
    $region36: #{tpu_custom_call.1} parent=1 // pred_region
      %903 = dma.done [#allocation4], 512
    $region37: #{tpu_custom_call.1} parent=1 // pred_fallthru
      _
    %904 = vsyncpa [#allocation3], 1
    %905 = vsyncpa [#allocation4], 1

</llo_original>
